<compile_context>
chip_gen: v7x
topology: tpu7x:2x2x1
jax: 0.10.0
libtpu: 0.0.40
codegen_flags: <defaults>
</compile_context>

<pallas_src>
import functools

import jax
import jax.numpy as jnp
from jax.experimental import pallas as pl
from jax.experimental.pallas import tpu as pltpu


def _cosine_kernel(x_ref, w_ref, xinv_ref, o_ref, acc_ref):
    """One (tm, tn) output tile, accumulated over the K (in_dim) grid axis.

    x_ref:    (tm, tk)  input tile, MXU operand dtype
    w_ref:    (tk, tn)  pre-normalized, pre-transposed weight tile (V/||V||).T
    xinv_ref: (tm, 1)   precomputed f32 inverse L2 norms of the X rows
    o_ref:    (tm, tn)  output tile
    acc_ref:  (tm, tn)  f32 accumulator (VMEM scratch)
    """
    k = pl.program_id(2)

    psum = jnp.dot(x_ref[...], w_ref[...], preferred_element_type=jnp.float32)

    @pl.when(k == 0)
    def _first():
        acc_ref[...] = psum          # no zero-fill + add on the first step

    @pl.when(k > 0)
    def _accum():
        acc_ref[...] += psum

    @pl.when(k == pl.num_programs(2) - 1)
    def _finalize():
        # Rank-1 normalization of the whole tile (weight norms already folded in).
        o_ref[...] = (acc_ref[...] * xinv_ref[...]).astype(o_ref.dtype)


def _round_up(a: int, m: int) -> int:
    return ((a + m - 1) // m) * m


def _sublane(dtype) -> int:
    # Native sublane packing: 8 rows for 32-bit, 16 for bf16, 32 for int8/fp8.
    return max(8, 32 // jnp.dtype(dtype).itemsize)


def _pick_tiles(B, D, O, operand_dtype, tm, tn, tk):
    tn_user = tn is not None
    sub = _sublane(operand_dtype)
    if tm is None:
        tm = min(512, _round_up(B, sub))
    if tn is None:
        tn = min(1024, _round_up(O, 128))
    if tk is None:
        tk = min(1024, _round_up(D, 128))
    # v7x megacore balance: if the parallel (i, j) grid would be a single tile,
    # split the output-column axis so both TensorCores get work.  Harmless on
    # single-TC v5e/v6e.
    if not tn_user:
        o128 = _round_up(O, 128)
        if _round_up(B, tm) // tm == 1 and tn >= o128 and o128 >= 256:
            tn = _round_up(o128 // 2, 128)
    return tm, tn, tk


def prepare_cosine_weight(weight_v, *, tn, tk, operand_dtype):
    """Fold weight_norm into V, transpose to (D, O) and pad to tile multiples.

    Do this once per weight (outside the per-step loop) for inference use.
    NOTE: like PyTorch weight_norm, an all-zero weight row yields NaN output.
    """
    O, D = weight_v.shape
    v32 = weight_v.astype(jnp.float32)
    w_inv = jax.lax.rsqrt(jnp.sum(v32 * v32, axis=-1))        # (O,)
    w_t = (v32 * w_inv[:, None]).T.astype(operand_dtype)       # (D, O)
    Kp, Np = _round_up(D, tk), _round_up(O, tn)
    return jnp.pad(w_t, ((0, Kp - D), (0, Np - O)))            # zero pad is exact


@functools.partial(
    jax.jit, static_argnames=("out_dim", "tm", "tn", "tk", "out_dtype"))
def cosine_layer_apply(x, w_prepared, *, out_dim, tm, tn, tk, out_dtype):
    """x: (B, in_dim); w_prepared: (Kp, Np) from prepare_cosine_weight."""
    B, D = x.shape
    Kp, Np = w_prepared.shape
    assert Kp % tk == 0 and Np % tn == 0 and Kp >= D
    operand_dtype = w_prepared.dtype

    # F.normalize eps: x / max(||x||, 1e-12) == x * rsqrt(max(sum x^2, 1e-24)).
    x32 = x.astype(jnp.float32)
    x_inv = jax.lax.rsqrt(
        jnp.maximum(jnp.sum(x32 * x32, axis=-1, keepdims=True), 1e-24))  # (B, 1)

    Mp = _round_up(B, tm)
    x_p = jnp.pad(x.astype(operand_dtype), ((0, Mp - B), (0, Kp - D)))
    xinv_p = jnp.pad(x_inv, ((0, Mp - B), (0, 0)))   # padded rows -> output 0

    grid = (Mp // tm, Np // tn, Kp // tk)

    out_padded = pl.pallas_call(
        _cosine_kernel,
        out_shape=jax.ShapeDtypeStruct((Mp, Np), out_dtype),
        grid_spec=pltpu.PrefetchScalarGridSpec(
            num_scalar_prefetch=0,
            grid=grid,
            in_specs=[
                pl.BlockSpec((tm, tk), lambda i, j, k: (i, k)),   # X
                pl.BlockSpec((tk, tn), lambda i, j, k: (k, j)),   # (V/||V||).T
                pl.BlockSpec((tm, 1), lambda i, j, k: (i, 0)),    # 1/||X_row||
            ],
            out_specs=pl.BlockSpec((tm, tn), lambda i, j, k: (i, j)),
            scratch_shapes=[
                pltpu.VMEM((tm, tn), jnp.float32),   # f32 matmul accumulator
            ],
        ),
        compiler_params=pltpu.CompilerParams(
            dimension_semantics=("parallel", "parallel", "arbitrary"),
            vmem_limit_bytes=64 * 1024 * 1024),
    )(x_p, w_prepared, xinv_p)

    return out_padded[:B, :out_dim]


def cosine_layer(x, weight_v, *, tm=None, tn=None, tk=None,
                 use_bf16_operands=True):
    """Convenience wrapper: x (B, in_dim), weight_v (out_dim, in_dim) -> (B, out_dim).

    use_bf16_operands: feed bf16 to the MXU when inputs are f32 (accumulation and
    normalization stay f32).  Set False for exact-f32 operands.
    """
    B, D = x.shape
    O, D2 = weight_v.shape
    assert D == D2, "weight_v must be (out_dim, in_dim)"

    operand_dtype = (jnp.bfloat16
                     if (use_bf16_operands and x.dtype == jnp.float32)
                     else x.dtype)
    tm, tn, tk = _pick_tiles(B, D, O, operand_dtype, tm, tn, tk)
    w_prepared = prepare_cosine_weight(
        weight_v, tn=tn, tk=tk, operand_dtype=operand_dtype)
    return cosine_layer_apply(
        x, w_prepared, out_dim=O, tm=tm, tn=tn, tk=tk, out_dtype=x.dtype)


def cosine_layer_ref(x, weight_v):
    """Pure-JAX reference matching the PyTorch forward."""
    x32 = x.astype(jnp.float32)
    v32 = weight_v.astype(jnp.float32)
    unit_x = x32 / jnp.maximum(
        jnp.linalg.norm(x32, axis=-1, keepdims=True), 1e-12)
    unit_v = v32 / jnp.linalg.norm(v32, axis=-1, keepdims=True)
    return (unit_x @ unit_v.T).astype(x.dtype)


if __name__ == "__main__":
    # TODO(synk): the module's `_is_forward` / weight_g re-fill bookkeeping is
    # stateful training-time init; weight_g == 1 is folded into the math here.

    # --- check 1: exact-f32 operand path, small shapes from the module ---
    batch, in_dim, out_dim = 8, 32, 16
    key = jax.random.PRNGKey(0)
    kx, kw = jax.random.split(key)
    x = jax.random.normal(kx, (batch, in_dim), dtype=jnp.float32)
    bound = 1.0 / (in_dim ** 0.5)  # nn.Linear default init bound
    weight_v = jax.random.uniform(
        kw, (out_dim, in_dim), dtype=jnp.float32, minval=-bound, maxval=bound)

    out = jax.block_until_ready(
        cosine_layer(x, weight_v, use_bf16_operands=False))
    ref = cosine_layer_ref(x, weight_v)
    assert out.shape == (batch, out_dim)
    assert jnp.allclose(out, ref, atol=2e-4, rtol=2e-4), "f32 mismatch vs reference"

    # --- check 2: bf16-operand default path, multi-tile grid + K accumulation ---
    B2, D2, O2 = 24, 384, 256
    k2x, k2w = jax.random.split(jax.random.PRNGKey(1))
    x2 = jax.random.normal(k2x, (B2, D2), dtype=jnp.float32)
    w2 = jax.random.normal(k2w, (O2, D2), dtype=jnp.float32) / (D2 ** 0.5)
    out2 = jax.block_until_ready(
        cosine_layer(x2, w2, tm=16, tn=128, tk=128))   # grid (2, 2, 3)
    ref2 = cosine_layer_ref(x2, w2)
    assert out2.shape == (B2, O2)
    assert jnp.allclose(out2, ref2, atol=2e-2, rtol=2e-2), "tiled bf16 mismatch"

    print("KERNEL_OK")
</pallas_src>

<mosaic_0001>
module attributes {stable_mosaic.version = 11 : i64} {
  func.func @_cosine_kernel(%arg0: i32, %arg1: i32, %arg2: i32, %arg3: memref<8x128xf32, #tpu.memory_space<vmem>>, %arg4: memref<128x128xf32, #tpu.memory_space<vmem>>, %arg5: memref<8x1xf32, #tpu.memory_space<vmem>>, %arg6: memref<8x128xf32, #tpu.memory_space<vmem>>, %arg7: memref<8x128xf32, #tpu.memory_space<vmem>>) attributes {dimension_semantics = [#tpu.dimension_semantics<parallel>, #tpu.dimension_semantics<parallel>, #tpu.dimension_semantics<arbitrary>], iteration_bounds = array<i64: 1, 1, 1>, scalar_prefetch = 0 : i64, scratch_operands = 1 : i64, tpu.core_type = #tpu.core_type<tc>, window_params = [{transform_indices = @transform_0, window_bounds = array<i64: 8, 128>}, {transform_indices = @transform_1, window_bounds = array<i64: 128, 128>}, {transform_indices = @transform_2, window_bounds = array<i64: 8, 1>}, {transform_indices = @transform_3, window_bounds = array<i64: 8, 128>}]} {
    %c0 = arith.constant 0 : index
    %c0_0 = arith.constant 0 : index
    %0 = vector.load %arg3[%c0, %c0_0] : memref<8x128xf32, #tpu.memory_space<vmem>>, vector<8x128xf32>
    %c0_1 = arith.constant 0 : index
    %c0_2 = arith.constant 0 : index
    %1 = vector.load %arg4[%c0_1, %c0_2] : memref<128x128xf32, #tpu.memory_space<vmem>>, vector<128x128xf32>
    %cst = arith.constant dense<0.000000e+00> : vector<8x128xf32>
    %2 = tpu.matmul %0, %1, %cst {dimension_numbers = #tpu.dot_dimension_numbers<[1], [0], [0], [1], [0, 0, 1, 1], [], []>} : vector<8x128xf32>, vector<128x128xf32>, vector<8x128xf32> -> vector<8x128xf32>
    %c0_i32 = arith.constant 0 : i32
    %3 = arith.cmpi eq, %arg2, %c0_i32 : i32
    %4 = arith.extui %3 : i1 to i32
    %c0_i32_3 = arith.constant 0 : i32
    %5 = arith.cmpi ne, %4, %c0_i32_3 : i32
    scf.if %5 {
      %c0_8 = arith.constant 0 : index
      %c0_9 = arith.constant 0 : index
      %12 = vector.load %arg7[%c0_8, %c0_9] : memref<8x128xf32, #tpu.memory_space<vmem>>, vector<8x128xf32>
      tpu.vector_store %arg7[%c0_8, %c0_9], %2 {strides = array<i32>} : memref<8x128xf32, #tpu.memory_space<vmem>>, vector<8x128xf32>,
    } else {
    }
    %c0_i32_4 = arith.constant 0 : i32
    %6 = arith.cmpi sgt, %arg2, %c0_i32_4 : i32
    %7 = arith.extui %6 : i1 to i32
    %c0_i32_5 = arith.constant 0 : i32
    %8 = arith.cmpi ne, %7, %c0_i32_5 : i32
    scf.if %8 {
      %c0_8 = arith.constant 0 : index
      %c0_9 = arith.constant 0 : index
      %12 = vector.load %arg7[%c0_8, %c0_9] : memref<8x128xf32, #tpu.memory_space<vmem>>, vector<8x128xf32>
      %13 = arith.addf %12, %2 : vector<8x128xf32>
      %c0_10 = arith.constant 0 : index
      %c0_11 = arith.constant 0 : index
      %14 = vector.load %arg7[%c0_10, %c0_11] : memref<8x128xf32, #tpu.memory_space<vmem>>, vector<8x128xf32>
      tpu.vector_store %arg7[%c0_10, %c0_11], %13 {strides = array<i32>} : memref<8x128xf32, #tpu.memory_space<vmem>>, vector<8x128xf32>,
    } else {
    }
    %c0_i32_6 = arith.constant 0 : i32
    %9 = arith.cmpi eq, %arg2, %c0_i32_6 : i32
    %10 = arith.extui %9 : i1 to i32
    %c0_i32_7 = arith.constant 0 : i32
    %11 = arith.cmpi ne, %10, %c0_i32_7 : i32
    scf.if %11 {
      %c0_8 = arith.constant 0 : index
      %c0_9 = arith.constant 0 : index
      %12 = vector.load %arg7[%c0_8, %c0_9] : memref<8x128xf32, #tpu.memory_space<vmem>>, vector<8x128xf32>
      %c0_10 = arith.constant 0 : index
      %c0_11 = arith.constant 0 : index
      %13 = vector.load %arg5[%c0_10, %c0_11] : memref<8x1xf32, #tpu.memory_space<vmem>>, vector<8x1xf32>
      %14 = vector.broadcast %13 : vector<8x1xf32> to vector<8x128xf32>
      %15 = arith.mulf %12, %14 : vector<8x128xf32>
      %c0_12 = arith.constant 0 : index
      %c0_13 = arith.constant 0 : index
      %16 = vector.load %arg6[%c0_12, %c0_13] : memref<8x128xf32, #tpu.memory_space<vmem>>, vector<8x128xf32>
      tpu.vector_store %arg6[%c0_12, %c0_13], %15 {strides = array<i32>} : memref<8x128xf32, #tpu.memory_space<vmem>>, vector<8x128xf32>,
    } else {
    }
    return
  }
  func.func @transform_0(%arg0: i32, %arg1: i32, %arg2: i32) -> (i32, i32) {
    %c0_i32 = arith.constant 0 : i32
    return %arg0, %arg2 : i32, i32
  }
  func.func @transform_1(%arg0: i32, %arg1: i32, %arg2: i32) -> (i32, i32) {
    %c0_i32 = arith.constant 0 : i32
    return %arg2, %arg1 : i32, i32
  }
  func.func @transform_2(%arg0: i32, %arg1: i32, %arg2: i32) -> (i32, i32) {
    %c0_i32 = arith.constant 0 : i32
    %c0_i32_0 = arith.constant 0 : i32
    return %arg0, %c0_i32 : i32, i32
  }
  func.func @transform_3(%arg0: i32, %arg1: i32, %arg2: i32) -> (i32, i32) {
    %c0_i32 = arith.constant 0 : i32
    return %arg0, %arg1 : i32, i32
  }
}

</mosaic_0001>

<llo_original>
// kernel: cosine_layer_apply.1
$region0: #{cosine_layer_apply.1}
  #allocation0 [shape = 'u32[]', space=smem, size = 0x4, offset = 0x4, fixed_abs, tag = 'smem constant byte address 0x4 - core index']
  #allocation1 [shape = 'u32[144,128]{1,0:T(1,128)}', space=vmem, size = 0x12000, scoped, tag = 'internal scratch']
  #allocation2 [shape = 'f32[8,128]{1,0:T(8,128)}', space=vmem, size = 0x1000, scoped, tag = 'scratch operand']
  %s0 = inlined_call_operand.hbm [shape: f32[8,128], index: 0, kind: input, shape index: {}]
  %s1 = inlined_call_operand.hbm [shape: f32[128,128], index: 1, kind: input, shape index: {}]
  %s2 = inlined_call_operand.hbm [shape: f32[8,1], index: 2, kind: input, shape index: {}]
  %s3 = inlined_call_operand.hbm [shape: f32[8,128], index: 3, kind: output, shape index: {}]
  %s4 = sld [smem:[#allocation0]]
  $region46: #{cosine_layer_apply.1} parent=0
    _
  %s6 = ssub.s32 1, %s4
  %s7 = scalar_select 0, %s6, %s4
  $region1: #{cosine_layer_apply.1} parent=0
    #allocation3 [shape = 'u8[4096]{0}', space=vmem, size = 0x1000, scoped, tag = 'input window, operand 0, single buffered']
    #allocation4 [shape = 's32[1]{0}', space=sflag, size = 0x4, scoped, tag = 'scoped memory for cosine_layer_apply.1']
    #allocation5 [shape = 's32[1]{0}', space=sflag, size = 0x4, scoped, tag = 'scoped memory for cosine_layer_apply.1']
    #allocation6 [shape = 'u8[65536]{0}', space=vmem, size = 0x10000, scoped, tag = 'input window, operand 1, single buffered']
    #allocation7 [shape = 's32[1]{0}', space=sflag, size = 0x4, scoped, tag = 'scoped memory for cosine_layer_apply.1']
    #allocation8 [shape = 'u8[4096]{0}', space=vmem, size = 0x1000, scoped, tag = 'input window, operand 2, single buffered']
    #allocation9 [shape = 'u8[4096]{0}', space=vmem, size = 0x1000, scoped, tag = 'output window, operand 0, single buffered']
    %8 = vsyncpa [#allocation4], 0
    %9 = vsyncpa [#allocation7], 0
    %10 = vsyncpa [#allocation5], 0
    // Predicated region
    $region2: #{cosine_layer_apply.1} parent=1 // pred_check
      _
    $region3: #{cosine_layer_apply.1} parent=1 // pred_check_branch
      %12 = sbr.rel (0) target = $region5
    $region4: #{cosine_layer_apply.1} parent=1 // pred_region
      %s14 = ssub.s32 128, 128
      %15 = vsyncadd [#allocation4], %s14
      %s17 = sshll.u32 [#allocation3], 4
      %s18 = int_to_ptr.vmem [resolvable:$true] %s17
      %20 = dma.hbm_to_vmem [thread:$0]  %s0, 128, %s18, [#allocation4]
    $region5: #{cosine_layer_apply.1} parent=1 // pred_fallthru
      _
    // Predicated region
    $region6: #{cosine_layer_apply.1} parent=1 // pred_check
      _
    $region7: #{cosine_layer_apply.1} parent=1 // pred_check_branch
      %22 = sbr.rel (0) target = $region9
    $region8: #{cosine_layer_apply.1} parent=1 // pred_region
      %s24 = ssub.s32 2048, 2048
      %25 = vsyncadd [#allocation7], %s24
      %s26 = sshll.u32 [#allocation6], 4
      %s27 = int_to_ptr.vmem [resolvable:$true] %s26
      %32 = dma.hbm_to_vmem [thread:$0]  %s1, 2048, %s27, [#allocation7], 128, 128, 8
    $region9: #{cosine_layer_apply.1} parent=1 // pred_fallthru
      _
    // Predicated region
    $region10: #{cosine_layer_apply.1} parent=1 // pred_check
      _
    $region11: #{cosine_layer_apply.1} parent=1 // pred_check_branch
      %34 = sbr.rel (0) target = $region13
    $region12: #{cosine_layer_apply.1} parent=1 // pred_region
      %s36 = ssub.s32 128, 128
      %37 = vsyncadd [#allocation7], %s36
      %s39 = sshll.u32 [#allocation8], 4
      %s40 = int_to_ptr.vmem [resolvable:$true] %s39
      %42 = dma.hbm_to_vmem [thread:$0]  %s2, 128, %s40, [#allocation7]
    $region13: #{cosine_layer_apply.1} parent=1 // pred_fallthru
      _
    // Predicated region
    $region14: #{cosine_layer_apply.1} parent=1 // pred_check
      _
    $region15: #{cosine_layer_apply.1} parent=1 // pred_check_branch
      %44 = sbr.rel (0) target = $region17
    $region16: #{cosine_layer_apply.1} parent=1 // pred_region
      %45 = dma.done [#allocation4], 128
    $region17: #{cosine_layer_apply.1} parent=1 // pred_fallthru
      _
    // Predicated region
    $region18: #{cosine_layer_apply.1} parent=1 // pred_check
      _
    $region19: #{cosine_layer_apply.1} parent=1 // pred_check_branch
      %47 = sbr.rel (0) target = $region21
    $region20: #{cosine_layer_apply.1} parent=1 // pred_region
      %48 = dma.done [#allocation7], 2048
    $region21: #{cosine_layer_apply.1} parent=1 // pred_fallthru
      _
    // Predicated region
    $region22: #{cosine_layer_apply.1} parent=1 // pred_check
      _
    $region23: #{cosine_layer_apply.1} parent=1 // pred_check_branch
      %50 = sbr.rel (0) target = $region25
    $region24: #{cosine_layer_apply.1} parent=1 // pred_region
      %51 = dma.done [#allocation7], 128
    $region25: #{cosine_layer_apply.1} parent=1 // pred_fallthru
      _
    %v52 = vld [vmem:[#allocation3] sm:$0xff]
    %v53 = vld [vmem:[#allocation6] sm:$0xff]
    %v54 = vld [vmem:[#allocation6 + $0x8] sm:$0xff]
    %v55 = vld [vmem:[#allocation6 + $0x10] sm:$0xff]
    %v56 = vld [vmem:[#allocation6 + $0x18] sm:$0xff]
    %v57 = vld [vmem:[#allocation6 + $0x20] sm:$0xff]
    %v58 = vld [vmem:[#allocation6 + $0x28] sm:$0xff]
    %v59 = vld [vmem:[#allocation6 + $0x30] sm:$0xff]
    %v60 = vld [vmem:[#allocation6 + $0x38] sm:$0xff]
    %v61 = vld [vmem:[#allocation6 + $0x40] sm:$0xff]
    %v62 = vld [vmem:[#allocation6 + $0x48] sm:$0xff]
    %v63 = vld [vmem:[#allocation6 + $0x50] sm:$0xff]
    %v64 = vld [vmem:[#allocation6 + $0x58] sm:$0xff]
    %v65 = vld [vmem:[#allocation6 + $0x60] sm:$0xff]
    %v66 = vld [vmem:[#allocation6 + $0x68] sm:$0xff]
    %v67 = vld [vmem:[#allocation6 + $0x70] sm:$0xff]
    %v68 = vld [vmem:[#allocation6 + $0x78] sm:$0xff]
    %69 = vmatprep.subr.mxu0 0.0
    %70 = vmatpush1.msra.mxu0 %v53
    %71 = vmatprep.subr.mxu0 0.0
    %72 = vmatpush1.msra.mxu0 %v54
    %73 = vmatprep.subr.mxu0 0.0
    %74 = vmatpush1.msra.mxu0 %v55
    %75 = vmatprep.subr.mxu0 0.0
    %76 = vmatpush1.msra.mxu0 %v56
    %77 = vmatprep.subr.mxu0 0.0
    %78 = vmatpush1.msra.mxu0 %v57
    %79 = vmatprep.subr.mxu0 0.0
    %80 = vmatpush1.msra.mxu0 %v58
    %81 = vmatprep.subr.mxu0 0.0
    %82 = vmatpush1.msra.mxu0 %v59
    %83 = vmatprep.subr.mxu0 0.0
    %84 = vmatpush1.msra.mxu0 %v60
    %85 = vmatprep.subr.mxu0 0.0
    %86 = vmatpush1.msra.mxu0 %v61
    %87 = vmatprep.subr.mxu0 0.0
    %88 = vmatpush1.msra.mxu0 %v62
    %89 = vmatprep.subr.mxu0 0.0
    %90 = vmatpush1.msra.mxu0 %v63
    %91 = vmatprep.subr.mxu0 0.0
    %92 = vmatpush1.msra.mxu0 %v64
    %93 = vmatprep.subr.mxu0 0.0
    %94 = vmatpush1.msra.mxu0 %v65
    %95 = vmatprep.subr.mxu0 0.0
    %96 = vmatpush1.msra.mxu0 %v66
    %97 = vmatprep.subr.mxu0 0.0
    %98 = vmatpush1.msra.mxu0 %v67
    %99 = vmatprep.subr.mxu0 0.0
    %100 = vmatpush1.msra.mxu0 %v68
    %101 = vmatprep.subr.mxu0 0.0
    %102 = vmatpush1.msra.mxu0 0.0
    %103 = vmatprep.subr.mxu0 0.0
    %104 = vmatpush1.msra.mxu0 0.0
    %105 = vmatprep.subr.mxu0 0.0
    %106 = vmatpush1.msra.mxu0 0.0
    %107 = vmatprep.subr.mxu0 0.0
    %108 = vmatpush1.msra.mxu0 0.0
    %109 = vmatprep.subr.mxu0 0.0
    %110 = vmatpush1.msra.mxu0 0.0
    %111 = vmatprep.subr.mxu0 0.0
    %112 = vmatpush1.msra.mxu0 0.0
    %113 = vmatprep.subr.mxu0 0.0
    %114 = vmatpush1.msra.mxu0 0.0
    %115 = vmatprep.subr.mxu0 0.0
    %116 = vmatpush1.msra.mxu0 0.0
    %117 = vmatprep.subr.mxu0 0.0
    %118 = vmatpush1.msra.mxu0 0.0
    %119 = vmatprep.subr.mxu0 0.0
    %120 = vmatpush1.msra.mxu0 0.0
    %121 = vmatprep.subr.mxu0 0.0
    %122 = vmatpush1.msra.mxu0 0.0
    %123 = vmatprep.subr.mxu0 0.0
    %124 = vmatpush1.msra.mxu0 0.0
    %125 = vmatprep.subr.mxu0 0.0
    %126 = vmatpush1.msra.mxu0 0.0
    %127 = vmatprep.subr.mxu0 0.0
    %128 = vmatpush1.msra.mxu0 0.0
    %129 = vmatprep.subr.mxu0 0.0
    %130 = vmatpush1.msra.mxu0 0.0
    %131 = vmatprep.subr.mxu0 0.0
    %132 = vmatpush1.msra.mxu0 0.0
    %133 = vmatprep.mubr.f32.mxu0 0.0
    %134 = vmatmul.mubr.f32.gmra.mrb[0].mxu0 %v52
    %v135 = vpop.f32.mrb[0].mxu0
    %v136 = vadd.f32 0.0, %v135
    %v137 = vpop.f32.mrb[0].mxu0
    %138 = vdwg.mxu0
    %p139 = scmp.eq.s32.totalorder 0, 0
    // Predicated region
    $region26: #{cosine_layer_apply.1} parent=1 // pred_check
      %p140 = pneg %p139
    $region27: #{cosine_layer_apply.1} parent=1 // pred_check_branch
      %142 = sbr.rel (%p140) target = $region29
    $region28: #{cosine_layer_apply.1} parent=1 // pred_region
      %143 = vst [vmem:[#allocation2] sm:$0xff] %v136
    $region29: #{cosine_layer_apply.1} parent=1 // pred_fallthru
      _
    %p144 = scmp.gt.s32.totalorder 0, 0
    // Predicated region
    $region30: #{cosine_layer_apply.1} parent=1 // pred_check
      %p145 = pneg %p144
    $region31: #{cosine_layer_apply.1} parent=1 // pred_check_branch
      %147 = sbr.rel (%p145) target = $region33
    $region32: #{cosine_layer_apply.1} parent=1 // pred_region
      %v148 = vld [vmem:[#allocation2] sm:$0xff]
      %v149 = vadd.f32 %v148, %v136
      %150 = vst [vmem:[#allocation2] sm:$0xff] %v149
    $region33: #{cosine_layer_apply.1} parent=1 // pred_fallthru
      _
    // Predicated region
    $region34: #{cosine_layer_apply.1} parent=1 // pred_check
      %p151 = pneg %p139
    $region35: #{cosine_layer_apply.1} parent=1 // pred_check_branch
      %153 = sbr.rel (%p151) target = $region37
    $region36: #{cosine_layer_apply.1} parent=1 // pred_region
      %v154 = vld [vmem:[#allocation2] sm:$0xff]
      %v155 = vld [vmem:[#allocation8] sm:$0xff]
      %157 = vset.pattern.permute.xlu0 0
      %158 = vperm.xlu0 %157, %v155
      %v159 = vpop.permute.xlu0 %158
      %v161 = vmul.f32 %v154, %v159
      %162 = vst [vmem:[#allocation9] sm:$0xff] %v161
    $region37: #{cosine_layer_apply.1} parent=1 // pred_fallthru
      _
    // Predicated region
    $region38: #{cosine_layer_apply.1} parent=1 // pred_check
      _
    $region39: #{cosine_layer_apply.1} parent=1 // pred_check_branch
      %164 = sbr.rel (0) target = $region41
    $region40: #{cosine_layer_apply.1} parent=1 // pred_region
      %s166 = ssub.s32 128, 128
      %167 = vsyncadd [#allocation5], %s166
      %s169 = sshll.u32 [#allocation9], 4
      %s170 = int_to_ptr.vmem [resolvable:$true] %s169
      %172 = dma.vmem_to_hbm [thread:$0]  %s170, 128, %s3, [#allocation5]
    $region41: #{cosine_layer_apply.1} parent=1 // pred_fallthru
      _
    // Predicated region
    $region42: #{cosine_layer_apply.1} parent=1 // pred_check
      _
    $region43: #{cosine_layer_apply.1} parent=1 // pred_check_branch
      %174 = sbr.rel (0) target = $region45
    $region44: #{cosine_layer_apply.1} parent=1 // pred_region
      %175 = dma.done [#allocation5], 128
    $region45: #{cosine_layer_apply.1} parent=1 // pred_fallthru
      _
    %176 = vsyncpa [#allocation4], 1
    %177 = vsyncpa [#allocation7], 1
    %178 = vsyncpa [#allocation5], 1

</llo_original>
